<compile_context>
chip_gen: v6e
topology: v6e:2x2x1
jax: 0.10.0
libtpu: 0.0.40
codegen_flags: <defaults>
</compile_context>

<pallas_src>
import jax
import jax.numpy as jnp
import numpy as np
from jax.experimental import pallas as pl
from jax.experimental.pallas import tpu as pltpu

# ---- hyperparameters (match the PyTorch module definition) ------------------
M = 3
NUM_CLASSES = 3
WINDOW_SIZE = 15
INPUT_SIZE = 4                                   # conv1 in_channels
HIDDEN_UNITS = 32
KSIZE = 3                                        # conv kernel
POOL = 3                                         # MaxPool1d kernel = stride
CONV_OUT_LEN = (WINDOW_SIZE - 1) // POOL + 1     # 5  (pooled length)
KC = KSIZE * INPUT_SIZE                          # 12 im2col features / position
COLS = WINDOW_SIZE * KC                          # 180 im2col features / sample
LM = CONV_OUT_LEN * M                            # 15 pooled features / sample
CONV_LANES = POOL * LM                           # 45 conv-output lanes (j-major)


def riis_krogh_kernel(xcol_ref, wbig_ref, bbig_ref, w1_ref, b1_ref,
                      w2_ref, b2_ref, out_ref):
    """Whole forward pass for one batch block; 3 MXU matmuls, resident in VMEM."""
    # Conv1d(pad=1) + bias + ReLU as ONE matmul: (TB, 180) @ (180, 45).
    conv = jnp.dot(xcol_ref[...], wbig_ref[...],
                   preferred_element_type=jnp.float32)
    conv = jnp.maximum(conv + bbig_ref[...], 0.0)                 # (TB, 45)

    # MaxPool1d(3,3): lanes are ordered j*15 + (t*3 + m), so the pool is just a
    # max over three static 15-lane slabs (pure VPU, no reshape / transpose).
    pooled = jnp.maximum(jnp.maximum(conv[:, 0:LM], conv[:, LM:2 * LM]),
                         conv[:, 2 * LM:3 * LM])                  # (TB, 15)

    # fc1 + ReLU (w1 columns pre-permuted to the t*3+m order), then fc2.
    h1 = jnp.maximum(
        jnp.dot(pooled, w1_ref[...], preferred_element_type=jnp.float32)
        + b1_ref[...], 0.0)                                       # (TB, 32)
    out_ref[...] = (jnp.dot(h1, w2_ref[...], preferred_element_type=jnp.float32)
                    + b2_ref[...])                                # (TB, 3)


def _prepare_params(params):
    """Re-layout the PyTorch parameters for the one-matmul-per-layer kernel."""
    conv_w, conv_b, fc1_w, fc1_b, fc2_w, fc2_b = params

    # Unfolded conv weight (180, 45): block-diagonal over conv positions,
    # output lane o = j*LM + t*M + m  for conv position w = POOL*t + j.
    wk = jnp.transpose(conv_w, (2, 1, 0)).reshape(KC, M)          # (k*C+c, m)
    wbig = jnp.zeros((COLS, CONV_LANES), jnp.float32)
    for w in range(WINDOW_SIZE):
        t, j = w // POOL, w % POOL
        col = j * LM + t * M
        wbig = wbig.at[w * KC:(w + 1) * KC, col:col + M].set(wk)
    bbig = jnp.tile(conv_b, POOL * CONV_OUT_LEN).reshape(1, CONV_LANES)

    # fc1.weight is (H, M*L) with PyTorch flatten index m*L + t (channel-major);
    # reorder its columns to t*M + m (the pooled-lane order) and transpose.
    w1 = jnp.transpose(fc1_w.reshape(HIDDEN_UNITS, M, CONV_OUT_LEN),
                       (0, 2, 1)).reshape(HIDDEN_UNITS, LM).T      # (15, 32)
    b1 = fc1_b.reshape(1, HIDDEN_UNITS)
    w2 = jnp.transpose(fc2_w)                                      # (32, 3)
    b2 = fc2_b.reshape(1, NUM_CLASSES)
    return wbig, bbig, w1, b1, w2, b2


def riis_krogh_forward(x, params, *, block_b=256):
    """x: (B, window_size, input_size) float32 — same as the PyTorch forward input."""
    B, W, C = x.shape
    assert (W, C) == (WINDOW_SIZE, INPUT_SIZE)
    wbig, bbig, w1, b1, w2, b2 = _prepare_params(params)

    # im2col (plain-JAX glue): feature index = w*KC + k*C + c, conv padding=1.
    x_pad = jnp.pad(x.astype(jnp.float32), ((0, 0), (1, 1), (0, 0)))
    xcol = jnp.concatenate([x_pad[:, k:k + WINDOW_SIZE, :] for k in range(KSIZE)],
                           axis=-1).reshape(B, COLS)               # (B, 180)

    # Batch tiling: one grid axis over batch blocks ("parallel" -> megacore on v7x).
    tb = B if B <= block_b else block_b
    if tb < B and tb % 8 != 0:
        tb = max(8, (tb // 8) * 8)                                 # keep (8,128) rule
    b_pad = pl.cdiv(B, tb) * tb
    if b_pad != B:
        xcol = jnp.pad(xcol, ((0, b_pad - B), (0, 0)))
    grid = (b_pad // tb,)

    out = pl.pallas_call(
        riis_krogh_kernel,
        grid=grid,
        out_shape=jax.ShapeDtypeStruct((b_pad, NUM_CLASSES), jnp.float32),
        in_specs=[
            pl.BlockSpec((tb, COLS), lambda i: (i, 0)),
            pl.BlockSpec((COLS, CONV_LANES), lambda i: (0, 0)),
            pl.BlockSpec((1, CONV_LANES), lambda i: (0, 0)),
            pl.BlockSpec((LM, HIDDEN_UNITS), lambda i: (0, 0)),
            pl.BlockSpec((1, HIDDEN_UNITS), lambda i: (0, 0)),
            pl.BlockSpec((HIDDEN_UNITS, NUM_CLASSES), lambda i: (0, 0)),
            pl.BlockSpec((1, NUM_CLASSES), lambda i: (0, 0)),
        ],
        out_specs=pl.BlockSpec((tb, NUM_CLASSES), lambda i: (i, 0)),
        compiler_params=pltpu.CompilerParams(dimension_semantics=("parallel",)),
    )(xcol, wbig, bbig, w1, b1, w2, b2)
    return out[:B]


def riis_krogh_reference(x, params):
    """Pure-JAX re-implementation of the PyTorch forward (for verification)."""
    conv_w, conv_b, fc1_w, fc1_b, fc2_w, fc2_b = params
    B, W, C = x.shape
    xc = jnp.transpose(x, (0, 2, 1))                               # x.permute(0,2,1)
    xp = jnp.pad(xc, ((0, 0), (0, 0), (1, 1)))
    y = sum(jnp.einsum('bcw,mc->bmw', xp[:, :, k:k + W], conv_w[:, :, k])
            for k in range(KSIZE)) + conv_b[None, :, None]
    y = jax.nn.relu(y)                                             # (B, M, W)
    pooled = y.reshape(B, M, CONV_OUT_LEN, POOL).max(axis=-1)      # MaxPool1d(3,3)
    flat = pooled.reshape(B, M * CONV_OUT_LEN)                     # flatten(start_dim=1)
    h = jax.nn.relu(flat @ fc1_w.T + fc1_b)
    return h @ fc2_w.T + fc2_b


def init_params(key):
    """Deterministic init with PyTorch-default-style uniform(-1/sqrt(fan_in), +)."""
    ks = jax.random.split(key, 6)
    kc = 1.0 / np.sqrt(INPUT_SIZE * KSIZE)
    conv_w = jax.random.uniform(ks[0], (M, INPUT_SIZE, KSIZE), jnp.float32, -kc, kc)
    conv_b = jax.random.uniform(ks[1], (M,), jnp.float32, -kc, kc)
    k1 = 1.0 / np.sqrt(M * CONV_OUT_LEN)
    fc1_w = jax.random.uniform(ks[2], (HIDDEN_UNITS, M * CONV_OUT_LEN), jnp.float32, -k1, k1)
    fc1_b = jax.random.uniform(ks[3], (HIDDEN_UNITS,), jnp.float32, -k1, k1)
    k2 = 1.0 / np.sqrt(HIDDEN_UNITS)
    fc2_w = jax.random.uniform(ks[4], (NUM_CLASSES, HIDDEN_UNITS), jnp.float32, -k2, k2)
    fc2_b = jax.random.uniform(ks[5], (NUM_CLASSES,), jnp.float32, -k2, k2)
    return conv_w, conv_b, fc1_w, fc1_b, fc2_w, fc2_b


if __name__ == "__main__":
    key = jax.random.PRNGKey(0)
    k_x, k_x2, k_p = jax.random.split(key, 3)
    params = init_params(k_p)

    # small batch (single grid step)
    x = jax.random.normal(k_x, (8, WINDOW_SIZE, INPUT_SIZE), jnp.float32)
    out = jax.block_until_ready(riis_krogh_forward(x, params))
    ref = jax.block_until_ready(riis_krogh_reference(x, params))
    assert out.shape == (8, NUM_CLASSES)
    np.testing.assert_allclose(np.asarray(out), np.asarray(ref), rtol=1e-5, atol=1e-5)

    # larger batch: exercises the batch grid (grid=(4,), "parallel" axis -> v7x megacore)
    x2 = jax.random.normal(k_x2, (64, WINDOW_SIZE, INPUT_SIZE), jnp.float32)
    out2 = jax.block_until_ready(riis_krogh_forward(x2, params, block_b=16))
    ref2 = jax.block_until_ready(riis_krogh_reference(x2, params))
    np.testing.assert_allclose(np.asarray(out2), np.asarray(ref2), rtol=1e-5, atol=1e-5)

    print("KERNEL_OK")
</pallas_src>

<mosaic_0001>
module attributes {stable_mosaic.version = 11 : i64} {
  func.func @riis_krogh_kernel(%arg0: i32, %arg1: memref<8x180xf32, #tpu.memory_space<vmem>>, %arg2: memref<180x45xf32, #tpu.memory_space<vmem>>, %arg3: memref<1x45xf32, #tpu.memory_space<vmem>>, %arg4: memref<15x32xf32, #tpu.memory_space<vmem>>, %arg5: memref<1x32xf32, #tpu.memory_space<vmem>>, %arg6: memref<32x3xf32, #tpu.memory_space<vmem>>, %arg7: memref<1x3xf32, #tpu.memory_space<vmem>>, %arg8: memref<8x3xf32, #tpu.memory_space<vmem>>) attributes {dimension_semantics = [#tpu.dimension_semantics<parallel>], iteration_bounds = array<i64: 1>, scalar_prefetch = 0 : i64, scratch_operands = 0 : i64, tpu.core_type = #tpu.core_type<tc>, window_params = [{transform_indices = @transform_0, window_bounds = array<i64: 8, 180>}, {pipeline_mode = #tpu.pipeline_mode<synchronous>, transform_indices = @transform_1, window_bounds = array<i64: 180, 45>}, {pipeline_mode = #tpu.pipeline_mode<synchronous>, transform_indices = @transform_2, window_bounds = array<i64: 1, 45>}, {pipeline_mode = #tpu.pipeline_mode<synchronous>, transform_indices = @transform_3, window_bounds = array<i64: 15, 32>}, {pipeline_mode = #tpu.pipeline_mode<synchronous>, transform_indices = @transform_4, window_bounds = array<i64: 1, 32>}, {pipeline_mode = #tpu.pipeline_mode<synchronous>, transform_indices = @transform_5, window_bounds = array<i64: 32, 3>}, {pipeline_mode = #tpu.pipeline_mode<synchronous>, transform_indices = @transform_6, window_bounds = array<i64: 1, 3>}, {transform_indices = @transform_7, window_bounds = array<i64: 8, 3>}]} {
    %c0 = arith.constant 0 : index
    %c0_0 = arith.constant 0 : index
    %0 = vector.load %arg1[%c0, %c0_0] : memref<8x180xf32, #tpu.memory_space<vmem>>, vector<8x180xf32>
    %c0_1 = arith.constant 0 : index
    %c0_2 = arith.constant 0 : index
    %1 = vector.load %arg2[%c0_1, %c0_2] : memref<180x45xf32, #tpu.memory_space<vmem>>, vector<180x45xf32>
    %cst = arith.constant dense<0.000000e+00> : vector<8x45xf32>
    %2 = tpu.matmul %0, %1, %cst {dimension_numbers = #tpu.dot_dimension_numbers<[1], [0], [0], [1], [0, 0, 1, 1], [], []>} : vector<8x180xf32>, vector<180x45xf32>, vector<8x45xf32> -> vector<8x45xf32>
    %c0_3 = arith.constant 0 : index
    %c0_4 = arith.constant 0 : index
    %3 = vector.load %arg3[%c0_3, %c0_4] : memref<1x45xf32, #tpu.memory_space<vmem>>, vector<1x45xf32>
    %4 = vector.broadcast %3 : vector<1x45xf32> to vector<8x45xf32>
    %5 = arith.addf %2, %4 : vector<8x45xf32>
    %cst_5 = arith.constant 0.000000e+00 : f32
    %6 = vector.broadcast %cst_5 : f32 to vector<8x45xf32>
    %7 = arith.maximumf %5, %6 : vector<8x45xf32>
    %8 = vector.extract_strided_slice %7 {offsets = [0, 0], sizes = [8, 15], strides = [1, 1]} : vector<8x45xf32> to vector<8x15xf32>
    %9 = vector.extract_strided_slice %7 {offsets = [0, 15], sizes = [8, 15], strides = [1, 1]} : vector<8x45xf32> to vector<8x15xf32>
    %10 = arith.maximumf %8, %9 : vector<8x15xf32>
    %11 = vector.extract_strided_slice %7 {offsets = [0, 30], sizes = [8, 15], strides = [1, 1]} : vector<8x45xf32> to vector<8x15xf32>
    %12 = arith.maximumf %10, %11 : vector<8x15xf32>
    %c0_6 = arith.constant 0 : index
    %c0_7 = arith.constant 0 : index
    %13 = vector.load %arg4[%c0_6, %c0_7] : memref<15x32xf32, #tpu.memory_space<vmem>>, vector<15x32xf32>
    %cst_8 = arith.constant dense<0.000000e+00> : vector<8x32xf32>
    %14 = tpu.matmul %12, %13, %cst_8 {dimension_numbers = #tpu.dot_dimension_numbers<[1], [0], [0], [1], [0, 0, 1, 1], [], []>} : vector<8x15xf32>, vector<15x32xf32>, vector<8x32xf32> -> vector<8x32xf32>
    %c0_9 = arith.constant 0 : index
    %c0_10 = arith.constant 0 : index
    %15 = vector.load %arg5[%c0_9, %c0_10] : memref<1x32xf32, #tpu.memory_space<vmem>>, vector<1x32xf32>
    %16 = vector.broadcast %15 : vector<1x32xf32> to vector<8x32xf32>
    %17 = arith.addf %14, %16 : vector<8x32xf32>
    %cst_11 = arith.constant 0.000000e+00 : f32
    %18 = vector.broadcast %cst_11 : f32 to vector<8x32xf32>
    %19 = arith.maximumf %17, %18 : vector<8x32xf32>
    %c0_12 = arith.constant 0 : index
    %c0_13 = arith.constant 0 : index
    %20 = vector.load %arg6[%c0_12, %c0_13] : memref<32x3xf32, #tpu.memory_space<vmem>>, vector<32x3xf32>
    %cst_14 = arith.constant dense<0.000000e+00> : vector<8x3xf32>
    %21 = tpu.matmul %19, %20, %cst_14 {dimension_numbers = #tpu.dot_dimension_numbers<[1], [0], [0], [1], [0, 0, 1, 1], [], []>} : vector<8x32xf32>, vector<32x3xf32>, vector<8x3xf32> -> vector<8x3xf32>
    %c0_15 = arith.constant 0 : index
    %c0_16 = arith.constant 0 : index
    %22 = vector.load %arg7[%c0_15, %c0_16] : memref<1x3xf32, #tpu.memory_space<vmem>>, vector<1x3xf32>
    %23 = vector.broadcast %22 : vector<1x3xf32> to vector<8x3xf32>
    %24 = arith.addf %21, %23 : vector<8x3xf32>
    %c0_17 = arith.constant 0 : index
    %c0_18 = arith.constant 0 : index
    %25 = vector.load %arg8[%c0_17, %c0_18] : memref<8x3xf32, #tpu.memory_space<vmem>>, vector<8x3xf32>
    tpu.vector_store %arg8[%c0_17, %c0_18], %24 {strides = array<i32>} : memref<8x3xf32, #tpu.memory_space<vmem>>, vector<8x3xf32>,
    return
  }
  func.func @transform_0(%arg0: i32) -> (i32, i32) {
    %c0_i32 = arith.constant 0 : i32
    %c0_i32_0 = arith.constant 0 : i32
    return %arg0, %c0_i32 : i32, i32
  }
  func.func @transform_1(%arg0: i32) -> (i32, i32) {
    %c0_i32 = arith.constant 0 : i32
    %c0_i32_0 = arith.constant 0 : i32
    %c0_i32_1 = arith.constant 0 : i32
    return %c0_i32, %c0_i32_0 : i32, i32
  }
  func.func @transform_2(%arg0: i32) -> (i32, i32) {
    %c0_i32 = arith.constant 0 : i32
    %c0_i32_0 = arith.constant 0 : i32
    %c0_i32_1 = arith.constant 0 : i32
    return %c0_i32, %c0_i32_0 : i32, i32
  }
  func.func @transform_3(%arg0: i32) -> (i32, i32) {
    %c0_i32 = arith.constant 0 : i32
    %c0_i32_0 = arith.constant 0 : i32
    %c0_i32_1 = arith.constant 0 : i32
    return %c0_i32, %c0_i32_0 : i32, i32
  }
  func.func @transform_4(%arg0: i32) -> (i32, i32) {
    %c0_i32 = arith.constant 0 : i32
    %c0_i32_0 = arith.constant 0 : i32
    %c0_i32_1 = arith.constant 0 : i32
    return %c0_i32, %c0_i32_0 : i32, i32
  }
  func.func @transform_5(%arg0: i32) -> (i32, i32) {
    %c0_i32 = arith.constant 0 : i32
    %c0_i32_0 = arith.constant 0 : i32
    %c0_i32_1 = arith.constant 0 : i32
    return %c0_i32, %c0_i32_0 : i32, i32
  }
  func.func @transform_6(%arg0: i32) -> (i32, i32) {
    %c0_i32 = arith.constant 0 : i32
    %c0_i32_0 = arith.constant 0 : i32
    %c0_i32_1 = arith.constant 0 : i32
    return %c0_i32, %c0_i32_0 : i32, i32
  }
  func.func @transform_7(%arg0: i32) -> (i32, i32) {
    %c0_i32 = arith.constant 0 : i32
    %c0_i32_0 = arith.constant 0 : i32
    return %arg0, %c0_i32 : i32, i32
  }
}

</mosaic_0001>

<llo_original>
// kernel: tpu_custom_call.1
$region0: #{tpu_custom_call.1}
  #allocation0 [shape = 'u32[]', space=smem, size = 0x4, offset = 0x4, fixed_abs, tag = 'smem constant byte address 0x4 - core index']
  #allocation1 [shape = 'u32[144,128]{1,0:T(1,128)}', space=vmem, size = 0x12000, scoped, tag = 'internal scratch']
  %s0 = inlined_call_operand.vmem [shape: f32[8,180], index: 0, kind: input, shape index: {}]
  %s1 = inlined_call_operand.vmem [shape: f32[180,45], index: 1, kind: input, shape index: {}]
  %s2 = inlined_call_operand.vmem [shape: f32[1,45], index: 2, kind: input, shape index: {}]
  %s3 = inlined_call_operand.vmem [shape: f32[15,32], index: 3, kind: input, shape index: {}]
  %s4 = inlined_call_operand.vmem [shape: f32[1,32], index: 4, kind: input, shape index: {}]
  %s5 = inlined_call_operand.vmem [shape: f32[32,3], index: 5, kind: input, shape index: {}]
  %s6 = inlined_call_operand.vmem [shape: f32[1,3], index: 6, kind: input, shape index: {}]
  %s7 = inlined_call_operand.vmem [shape: f32[8,3], index: 7, kind: output, shape index: {}]
  %s8 = sld [smem:[#allocation0]]
  $region38: #{tpu_custom_call.1} parent=0
    _
  %s10 = ssub.s32 1, %s8
  %s11 = scalar_select 0, %s10, %s8
  // Predicated region
  $region2: #{tpu_custom_call.1} parent=0 // pred_check
    _
  $region3: #{tpu_custom_call.1} parent=0 // pred_check_branch
    %13 = sbr.rel (0) target = $region5
  $region4: #{tpu_custom_call.1} parent=0 // pred_region
    _
  $region5: #{tpu_custom_call.1} parent=0 // pred_fallthru
    _
  // Predicated region
  $region6: #{tpu_custom_call.1} parent=0 // pred_check
    _
  $region7: #{tpu_custom_call.1} parent=0 // pred_check_branch
    %15 = sbr.rel (0) target = $region9
  $region8: #{tpu_custom_call.1} parent=0 // pred_region
    _
  $region9: #{tpu_custom_call.1} parent=0 // pred_fallthru
    _
  // Predicated region
  $region10: #{tpu_custom_call.1} parent=0 // pred_check
    _
  $region11: #{tpu_custom_call.1} parent=0 // pred_check_branch
    %17 = sbr.rel (0) target = $region13
  $region12: #{tpu_custom_call.1} parent=0 // pred_region
    _
  $region13: #{tpu_custom_call.1} parent=0 // pred_fallthru
    _
  // Predicated region
  $region14: #{tpu_custom_call.1} parent=0 // pred_check
    _
  $region15: #{tpu_custom_call.1} parent=0 // pred_check_branch
    %19 = sbr.rel (0) target = $region17
  $region16: #{tpu_custom_call.1} parent=0 // pred_region
    _
  $region17: #{tpu_custom_call.1} parent=0 // pred_fallthru
    _
  // Predicated region
  $region18: #{tpu_custom_call.1} parent=0 // pred_check
    _
  $region19: #{tpu_custom_call.1} parent=0 // pred_check_branch
    %21 = sbr.rel (0) target = $region21
  $region20: #{tpu_custom_call.1} parent=0 // pred_region
    _
  $region21: #{tpu_custom_call.1} parent=0 // pred_fallthru
    _
  // Predicated region
  $region22: #{tpu_custom_call.1} parent=0 // pred_check
    _
  $region23: #{tpu_custom_call.1} parent=0 // pred_check_branch
    %23 = sbr.rel (0) target = $region25
  $region24: #{tpu_custom_call.1} parent=0 // pred_region
    _
  $region25: #{tpu_custom_call.1} parent=0 // pred_fallthru
    _
  // Predicated region
  $region26: #{tpu_custom_call.1} parent=0 // pred_check
    _
  $region27: #{tpu_custom_call.1} parent=0 // pred_check_branch
    %25 = sbr.rel (0) target = $region29
  $region28: #{tpu_custom_call.1} parent=0 // pred_region
    _
  $region29: #{tpu_custom_call.1} parent=0 // pred_fallthru
    _
  %v26 = vld [vmem:[%s0] sm:$0xff]
  %v27 = vld [vmem:[%s0 + $0x8] sm:$0xff]
  %v28 = vld [vmem:[%s1] sm:$0xff]
  %v29 = vld [vmem:[%s1 + $0x8] sm:$0xff]
  %v30 = vld [vmem:[%s1 + $0x10] sm:$0xff]
  %v31 = vld [vmem:[%s1 + $0x18] sm:$0xff]
  %v32 = vld [vmem:[%s1 + $0x20] sm:$0xff]
  %v33 = vld [vmem:[%s1 + $0x28] sm:$0xff]
  %v34 = vld [vmem:[%s1 + $0x30] sm:$0xff]
  %v35 = vld [vmem:[%s1 + $0x38] sm:$0xff]
  %v36 = vld [vmem:[%s1 + $0x40] sm:$0xff]
  %v37 = vld [vmem:[%s1 + $0x48] sm:$0xff]
  %v38 = vld [vmem:[%s1 + $0x50] sm:$0xff]
  %v39 = vld [vmem:[%s1 + $0x58] sm:$0xff]
  %v40 = vld [vmem:[%s1 + $0x60] sm:$0xff]
  %v41 = vld [vmem:[%s1 + $0x68] sm:$0xff]
  %v42 = vld [vmem:[%s1 + $0x70] sm:$0xff]
  %v43 = vld [vmem:[%s1 + $0x78] sm:$0xff]
  %v44 = vld [vmem:[%s1 + $0x80] sm:$0xff]
  %v45 = vld [vmem:[%s1 + $0x88] sm:$0xff]
  %v46 = vld [vmem:[%s1 + $0x90] sm:$0xff]
  %v47 = vld [vmem:[%s1 + $0x98] sm:$0xff]
  %v48 = vld [vmem:[%s1 + $0xa0] sm:$0xff]
  %v49 = vld [vmem:[%s1 + $0xa8] sm:$0xff]
  %v50 = vld [vmem:[%s1 + $0xb0] sm:$0xf]
  %v51 = vld [vmem:[%s2] sm:$0x1]
  %v53 = vlaneseq
  %v54 = vshrl.u32 %v53, 7
  %v55 = vsub.s32 0, %v54
  %v56 = vrot.slane %v51, %v55
  %vm58 = vcmask 424960
  %v60 = vsel %vm58, %v27, 0
  %vm62 = vcmask 1043456
  %v64 = vsel %vm62, %v50, 0
  %66 = vmatprep.subr.mxu0 0.0
  %67 = vmatpush1.msra.mxu0 %v43
  %68 = vmatprep.subr.mxu0 0.0
  %69 = vmatpush1.msra.mxu0 %v42
  %70 = vmatprep.subr.mxu0 0.0
  %71 = vmatpush1.msra.mxu0 %v41
  %72 = vmatprep.subr.mxu0 0.0
  %73 = vmatpush1.msra.mxu0 %v40
  %74 = vmatprep.subr.mxu0 0.0
  %75 = vmatpush1.msra.mxu0 %v39
  %76 = vmatprep.subr.mxu0 0.0
  %77 = vmatpush1.msra.mxu0 %v38
  %78 = vmatprep.subr.mxu0 0.0
  %79 = vmatpush1.msra.mxu0 %v37
  %80 = vmatprep.subr.mxu0 0.0
  %81 = vmatpush1.msra.mxu0 %v36
  %82 = vmatprep.subr.mxu0 0.0
  %83 = vmatpush1.msra.mxu0 %v35
  %84 = vmatprep.subr.mxu0 0.0
  %85 = vmatpush1.msra.mxu0 %v34
  %86 = vmatprep.subr.mxu0 0.0
  %87 = vmatpush1.msra.mxu0 %v33
  %88 = vmatprep.subr.mxu0 0.0
  %89 = vmatpush1.msra.mxu0 %v32
  %90 = vmatprep.subr.mxu0 0.0
  %91 = vmatpush1.msra.mxu0 %v31
  %92 = vmatprep.subr.mxu0 0.0
  %93 = vmatpush1.msra.mxu0 %v30
  %94 = vmatprep.subr.mxu0 0.0
  %95 = vmatpush1.msra.mxu0 %v29
  %96 = vmatprep.subr.mxu0 0.0
  %97 = vmatpush1.msra.mxu0 %v28
  %98 = vmatprep.subr.mxu0 0.0
  %99 = vmatpush2.msra.mxu0 0.0
  %100 = vmatprep.subr.mxu0 0.0
  %101 = vmatpush2.msra.mxu0 0.0
  %102 = vmatprep.subr.mxu0 0.0
  %103 = vmatpush2.msra.mxu0 0.0
  %104 = vmatprep.subr.mxu0 0.0
  %105 = vmatpush2.msra.mxu0 0.0
  %106 = vmatprep.subr.mxu0 0.0
  %107 = vmatpush2.msra.mxu0 0.0
  %108 = vmatprep.subr.mxu0 0.0
  %109 = vmatpush2.msra.mxu0 0.0
  %110 = vmatprep.subr.mxu0 0.0
  %111 = vmatpush2.msra.mxu0 0.0
  %112 = vmatprep.subr.mxu0 0.0
  %113 = vmatpush2.msra.mxu0 0.0
  %114 = vmatprep.subr.mxu0 0.0
  %115 = vmatpush2.msra.mxu0 0.0
  %116 = vmatprep.subr.mxu0 0.0
  %117 = vmatpush2.msra.mxu0 %v64
  %118 = vmatprep.subr.mxu0 0.0
  %119 = vmatpush2.msra.mxu0 %v49
  %120 = vmatprep.subr.mxu0 0.0
  %121 = vmatpush2.msra.mxu0 %v48
  %122 = vmatprep.subr.mxu0 0.0
  %123 = vmatpush2.msra.mxu0 %v47
  %124 = vmatprep.subr.mxu0 0.0
  %125 = vmatpush2.msra.mxu0 %v46
  %126 = vmatprep.subr.mxu0 0.0
  %127 = vmatpush2.msra.mxu0 %v45
  %128 = vmatprep.subr.mxu0 0.0
  %129 = vmatpush2.msra.mxu0 %v44
  %130 = vmatprep.mubr.f32.mxu0 %v60
  %131 = vmatmul.mubr.f32.gmra.mxu0 %v26
  %v132 = vpop.f32.mrf.mxu0
  %v133 = vadd.f32 %v56, %v132
  %v134 = vpop.f32.mrf.mxu0
  %135 = vdwg.mxu0
  %v136 = vmax.f32 %v133, 0.0
  %138 = vrot.lane.b32.xlu0 %v136, 113
  %v139 = vpop.permute.xlu0 %138
  %v141 = vmax.f32 %v136, %v139
  %142 = vrot.lane.b32.xlu0 %v136, 98
  %v143 = vpop.permute.xlu0 %142
  %v145 = vmax.f32 %v141, %v143
  %v146 = vld [vmem:[%s3] sm:$0xff]
  %v147 = vld [vmem:[%s3 + $0x8] sm:$0x7f]
  %v148 = vld [vmem:[%s4] sm:$0x1]
  %v150 = vlaneseq
  %v151 = vshrl.u32 %v150, 7
  %v152 = vsub.s32 0, %v151
  %v153 = vrot.slane %v148, %v152
  %vm155 = vcmask 121856
  %v157 = vsel %vm155, %v145, 0
  %vm159 = vcmask 1046528
  %v161 = vsel %vm159, %v147, 0
  %163 = vmatprep.subr.mxu0 0.0
  %164 = vmatpush1.msra.mxu0 0.0
  %165 = vmatprep.subr.mxu0 0.0
  %166 = vmatpush1.msra.mxu0 0.0
  %167 = vmatprep.subr.mxu0 0.0
  %168 = vmatpush1.msra.mxu0 0.0
  %169 = vmatprep.subr.mxu0 0.0
  %170 = vmatpush1.msra.mxu0 0.0
  %171 = vmatprep.subr.mxu0 0.0
  %172 = vmatpush1.msra.mxu0 0.0
  %173 = vmatprep.subr.mxu0 0.0
  %174 = vmatpush1.msra.mxu0 0.0
  %175 = vmatprep.subr.mxu0 0.0
  %176 = vmatpush1.msra.mxu0 0.0
  %177 = vmatprep.subr.mxu0 0.0
  %178 = vmatpush1.msra.mxu0 0.0
  %179 = vmatprep.subr.mxu0 0.0
  %180 = vmatpush1.msra.mxu0 0.0
  %181 = vmatprep.subr.mxu0 0.0
  %182 = vmatpush1.msra.mxu0 0.0
  %183 = vmatprep.subr.mxu0 0.0
  %184 = vmatpush1.msra.mxu0 0.0
  %185 = vmatprep.subr.mxu0 0.0
  %186 = vmatpush1.msra.mxu0 0.0
  %187 = vmatprep.subr.mxu0 0.0
  %188 = vmatpush1.msra.mxu0 0.0
  %189 = vmatprep.subr.mxu0 0.0
  %190 = vmatpush1.msra.mxu0 0.0
  %191 = vmatprep.subr.mxu0 0.0
  %192 = vmatpush1.msra.mxu0 %v161
  %193 = vmatprep.subr.mxu0 0.0
  %194 = vmatpush1.msra.mxu0 %v146
  %195 = vmatprep.subr.mxu0 0.0
  %196 = vmatpush2.msra.mxu0 0.0
  %197 = vmatprep.subr.mxu0 0.0
  %198 = vmatpush2.msra.mxu0 0.0
  %199 = vmatprep.subr.mxu0 0.0
  %200 = vmatpush2.msra.mxu0 0.0
  %201 = vmatprep.subr.mxu0 0.0
  %202 = vmatpush2.msra.mxu0 0.0
  %203 = vmatprep.subr.mxu0 0.0
  %204 = vmatpush2.msra.mxu0 0.0
  %205 = vmatprep.subr.mxu0 0.0
  %206 = vmatpush2.msra.mxu0 0.0
  %207 = vmatprep.subr.mxu0 0.0
  %208 = vmatpush2.msra.mxu0 0.0
  %209 = vmatprep.subr.mxu0 0.0
  %210 = vmatpush2.msra.mxu0 0.0
  %211 = vmatprep.subr.mxu0 0.0
  %212 = vmatpush2.msra.mxu0 0.0
  %213 = vmatprep.subr.mxu0 0.0
  %214 = vmatpush2.msra.mxu0 0.0
  %215 = vmatprep.subr.mxu0 0.0
  %216 = vmatpush2.msra.mxu0 0.0
  %217 = vmatprep.subr.mxu0 0.0
  %218 = vmatpush2.msra.mxu0 0.0
  %219 = vmatprep.subr.mxu0 0.0
  %220 = vmatpush2.msra.mxu0 0.0
  %221 = vmatprep.subr.mxu0 0.0
  %222 = vmatpush2.msra.mxu0 0.0
  %223 = vmatprep.subr.mxu0 0.0
  %224 = vmatpush2.msra.mxu0 0.0
  %225 = vmatprep.subr.mxu0 0.0
  %226 = vmatpush2.msra.mxu0 0.0
  %227 = vmatprep.mubr.f32.mxu0 0.0
  %228 = vmatmul.mubr.f32.gmra.mxu0 %v157
  %v229 = vpop.f32.mrf.mxu0
  %v230 = vadd.f32 %v153, %v229
  %v231 = vpop.f32.mrf.mxu0
  %232 = vdwg.mxu0
  %v233 = vmax.f32 %v230, 0.0
  %v234 = vld [vmem:[%s5] sm:$0xff]
  %v235 = vld [vmem:[%s5 + $0x8] sm:$0xff]
  %v236 = vld [vmem:[%s5 + $0x10] sm:$0xff]
  %v237 = vld [vmem:[%s5 + $0x18] sm:$0xff]
  %v238 = vld [vmem:[%s6] sm:$0x1]
  %v240 = vlaneseq
  %v241 = vshrl.u32 %v240, 7
  %v242 = vsub.s32 0, %v241
  %v243 = vrot.slane %v238, %v242
  %vm245 = vcmask 261120
  %v247 = vsel %vm245, %v233, 0
  %249 = vmatprep.subr.mxu0 0.0
  %250 = vmatpush1.msra.mxu0 0.0
  %251 = vmatprep.subr.mxu0 0.0
  %252 = vmatpush1.msra.mxu0 0.0
  %253 = vmatprep.subr.mxu0 0.0
  %254 = vmatpush1.msra.mxu0 0.0
  %255 = vmatprep.subr.mxu0 0.0
  %256 = vmatpush1.msra.mxu0 0.0
  %257 = vmatprep.subr.mxu0 0.0
  %258 = vmatpush1.msra.mxu0 0.0
  %259 = vmatprep.subr.mxu0 0.0
  %260 = vmatpush1.msra.mxu0 0.0
  %261 = vmatprep.subr.mxu0 0.0
  %262 = vmatpush1.msra.mxu0 0.0
  %263 = vmatprep.subr.mxu0 0.0
  %264 = vmatpush1.msra.mxu0 0.0
  %265 = vmatprep.subr.mxu0 0.0
  %266 = vmatpush1.msra.mxu0 0.0
  %267 = vmatprep.subr.mxu0 0.0
  %268 = vmatpush1.msra.mxu0 0.0
  %269 = vmatprep.subr.mxu0 0.0
  %270 = vmatpush1.msra.mxu0 0.0
  %271 = vmatprep.subr.mxu0 0.0
  %272 = vmatpush1.msra.mxu0 0.0
  %273 = vmatprep.subr.mxu0 0.0
  %274 = vmatpush1.msra.mxu0 %v237
  %275 = vmatprep.subr.mxu0 0.0
  %276 = vmatpush1.msra.mxu0 %v236
  %277 = vmatprep.subr.mxu0 0.0
  %278 = vmatpush1.msra.mxu0 %v235
  %279 = vmatprep.subr.mxu0 0.0
  %280 = vmatpush1.msra.mxu0 %v234
  %281 = vmatprep.subr.mxu0 0.0
  %282 = vmatpush2.msra.mxu0 0.0
  %283 = vmatprep.subr.mxu0 0.0
  %284 = vmatpush2.msra.mxu0 0.0
  %285 = vmatprep.subr.mxu0 0.0
  %286 = vmatpush2.msra.mxu0 0.0
  %287 = vmatprep.subr.mxu0 0.0
  %288 = vmatpush2.msra.mxu0 0.0
  %289 = vmatprep.subr.mxu0 0.0
  %290 = vmatpush2.msra.mxu0 0.0
  %291 = vmatprep.subr.mxu0 0.0
  %292 = vmatpush2.msra.mxu0 0.0
  %293 = vmatprep.subr.mxu0 0.0
  %294 = vmatpush2.msra.mxu0 0.0
  %295 = vmatprep.subr.mxu0 0.0
  %296 = vmatpush2.msra.mxu0 0.0
  %297 = vmatprep.subr.mxu0 0.0
  %298 = vmatpush2.msra.mxu0 0.0
  %299 = vmatprep.subr.mxu0 0.0
  %300 = vmatpush2.msra.mxu0 0.0
  %301 = vmatprep.subr.mxu0 0.0
  %302 = vmatpush2.msra.mxu0 0.0
  %303 = vmatprep.subr.mxu0 0.0
  %304 = vmatpush2.msra.mxu0 0.0
  %305 = vmatprep.subr.mxu0 0.0
  %306 = vmatpush2.msra.mxu0 0.0
  %307 = vmatprep.subr.mxu0 0.0
  %308 = vmatpush2.msra.mxu0 0.0
  %309 = vmatprep.subr.mxu0 0.0
  %310 = vmatpush2.msra.mxu0 0.0
  %311 = vmatprep.subr.mxu0 0.0
  %312 = vmatpush2.msra.mxu0 0.0
  %313 = vmatprep.mubr.f32.mxu0 0.0
  %314 = vmatmul.mubr.f32.gmra.mxu0 %v247
  %v315 = vpop.f32.mrf.mxu0
  %v316 = vadd.f32 %v243, %v315
  %v317 = vpop.f32.mrf.mxu0
  %318 = vdwg.mxu0
  %vm319 = vcmask 23552
  %320 = vst.msk [vmem:[%s7] sm:$0xff] %vm319, %v316
  // Predicated region
  $region30: #{tpu_custom_call.1} parent=0 // pred_check
    _
  $region31: #{tpu_custom_call.1} parent=0 // pred_check_branch
    %322 = sbr.rel (0) target = $region33
  $region32: #{tpu_custom_call.1} parent=0 // pred_region
    _
  $region33: #{tpu_custom_call.1} parent=0 // pred_fallthru
    _
  // Predicated region
  $region34: #{tpu_custom_call.1} parent=0 // pred_check
    _
  $region35: #{tpu_custom_call.1} parent=0 // pred_check_branch
    %324 = sbr.rel (0) target = $region37
  $region36: #{tpu_custom_call.1} parent=0 // pred_region
    _
  $region37: #{tpu_custom_call.1} parent=0 // pred_fallthru
    _

</llo_original>
